<compile_context>
chip_gen: v5e
topology: v5e:2x2
jax: 0.10.0
libtpu: 0.0.40
codegen_flags: <defaults>
</compile_context>

<pallas_src>
import jax
import jax.numpy as jnp
from jax.experimental import pallas as pl
from jax.experimental.pallas import tpu as pltpu

_LANE = 128
_MIB = 1024 * 1024


def _addcoords_kernel(coords_ref, x_ref, o_ref):
    # coords_ref: (1, 3,   ...)  batch-invariant coordinate channels
    # x_ref:      (1, C,   ...)
    # o_ref:      (1, C+3, ...)
    C = x_ref.shape[1]
    o_ref[:, :C] = x_ref[...]        # pass-through of the original channels
    o_ref[:, C:] = coords_ref[...]   # single fused store of xx / yy / rr


def _round_up(v, m):
    return -(-v // m) * m


def _vmem_capacity_bytes():
    """Physical per-TensorCore VMEM; conservative (v7x-class) fallback."""
    try:
        cap = int(getattr(pltpu.get_tpu_info(), "vmem_capacity_bytes", 0) or 0)
        if cap > 0:
            return cap
    except Exception:
        pass
    return 64 * _MIB


def _pick_tile(extent, unit_bytes, mult, budget_bytes, min_tiles):
    """Largest multiple-of-`mult` tile along an axis of size `extent` whose
    double-buffered working set (`unit_bytes` per element of the axis) fits
    `budget_bytes`, capped so the grid has >= `min_tiles` steps along this
    axis whenever `extent` allows a split."""
    t = budget_bytes // max(unit_bytes, 1)
    t = max(mult, (t // mult) * mult)
    if min_tiles > 1 and extent > mult:
        cap = _round_up(-(-extent // min_tiles), mult)
        t = min(t, cap)
    return min(t, extent)


def add_coords(x):
    """AddCoords(with_r=True) forward: (B, C, H, W) -> (B, C+3, H, W)."""
    B, C, H, W = x.shape
    dt = x.dtype
    itemsize = jnp.dtype(dt).itemsize
    HW = H * W
    sub_mult = max(8, 32 // itemsize)        # sublane tile: 8 f32 / 16 bf16 / 32 int8

    # ---- batch-invariant coordinate planes, hoisted out of the kernel ------
    # Computed directly in the I/O dtype (same op sequence as the reference).
    ii = jnp.broadcast_to(jnp.arange(H, dtype=dt)[:, None], (H, W))
    jj = jnp.broadcast_to(jnp.arange(W, dtype=dt)[None, :], (H, W))
    xx = ii / (H - 1) * 2 - 1
    yy = jj / (W - 1) * 2 - 1
    rr = jnp.sqrt((xx - 0.5) ** 2 + (yy - 0.5) ** 2)
    coords = jnp.stack([xx, yy, rr], axis=0)[None]          # (1, 3, H, W)

    # ---- per-generation VMEM policy -----------------------------------------
    cap = _vmem_capacity_bytes()
    if cap <= 64 * _MIB:                     # v7x-class: 64 MiB per TensorCore
        budget, vmem_limit = 16 * _MIB, 48 * _MIB
    else:                                    # v5e / v6e: 128 MiB
        budget, vmem_limit = 32 * _MIB, 96 * _MIB

    min_tiles = -(-4 // B)                   # keep >= 4 total grid steps (2 TCs on v7x)

    # ---- lane-dense layout + tiling -----------------------------------------
    if HW % _LANE == 0:
        rows, lane = HW // _LANE, _LANE
        x_k = x.reshape(B, C, rows, lane)                    # free: contiguous NCHW
        coords_k = coords.reshape(1, 3, rows, lane)
        unit = 2 * (2 * C + 6) * lane * itemsize             # bytes/row, double-buffered
        t = _pick_tile(rows, unit, sub_mult, budget, min_tiles)
        n_tiles = pl.cdiv(rows, t)
        min_ws = unit * min(sub_mult, rows)
        in_specs = [pl.BlockSpec((1, 3, t, lane), lambda r, b: (0, 0, r, 0)),
                    pl.BlockSpec((1, C, t, lane), lambda r, b: (b, 0, r, 0))]
        out_spec = pl.BlockSpec((1, C + 3, t, lane), lambda r, b: (b, 0, r, 0))
        out_shape = jax.ShapeDtypeStruct((B, C + 3, rows, lane), dt)
    else:
        # Flatten spatial and tile the lane axis in multiples of 128; only the
        # final block is partial (Pallas clips the out-of-bounds writeback).
        x_k = x.reshape(B, C, HW)
        coords_k = coords.reshape(1, 3, HW)
        unit = 2 * (_round_up(C, sub_mult) + _round_up(C + 3, sub_mult)
                    + _round_up(3, sub_mult)) * itemsize     # bytes/lane element
        t = _pick_tile(HW, unit, _LANE, budget, min_tiles)
        n_tiles = pl.cdiv(HW, t)
        min_ws = unit * min(_LANE, HW)
        in_specs = [pl.BlockSpec((1, 3, t), lambda s, b: (0, 0, s)),
                    pl.BlockSpec((1, C, t), lambda s, b: (b, 0, s))]
        out_spec = pl.BlockSpec((1, C + 3, t), lambda s, b: (b, 0, s))
        out_shape = jax.ShapeDtypeStruct((B, C + 3, HW), dt)

    if min_ws > vmem_limit:
        # Very-large-C escape hatch: grow the scoped-VMEM limit, bounded by the
        # physical capacity minus headroom for Mosaic internal scratch.
        # TODO(synk): add a channel-tiling grid axis for C so large that even a
        # single sublane-tile of channels overflows physical VMEM.
        vmem_limit = max(vmem_limit, min(min_ws * 5 // 4, cap - 8 * _MIB))

    bytes_accessed = (B * C * HW + B * (C + 3) * HW + 3 * HW) * itemsize

    out = pl.pallas_call(
        _addcoords_kernel,
        out_shape=out_shape,
        grid_spec=pltpu.PrefetchScalarGridSpec(
            num_scalar_prefetch=0,
            grid=(n_tiles, B),        # batch innermost -> coords tile stays resident
            in_specs=in_specs,
            out_specs=out_spec,
        ),
        compiler_params=pltpu.CompilerParams(
            dimension_semantics=("parallel", "parallel"),
            vmem_limit_bytes=vmem_limit,
        ),
        cost_estimate=pl.CostEstimate(
            flops=0, transcendentals=0, bytes_accessed=bytes_accessed),
    )(coords_k, x_k)

    return out.reshape(B, C + 3, H, W)


def _reference(x):
    """Pure-JAX reference mirroring the PyTorch semantics."""
    B, C, H, W = x.shape
    dt = x.dtype
    ii = jnp.broadcast_to(jnp.arange(H, dtype=dt)[:, None], (H, W))
    jj = jnp.broadcast_to(jnp.arange(W, dtype=dt)[None, :], (H, W))
    xx = ii / (H - 1) * 2 - 1
    yy = jj / (W - 1) * 2 - 1
    rr = jnp.sqrt((xx - 0.5) ** 2 + (yy - 0.5) ** 2)
    xx_b = jnp.broadcast_to(xx[None, None], (B, 1, H, W))
    yy_b = jnp.broadcast_to(yy[None, None], (B, 1, H, W))
    rr_b = jnp.broadcast_to(rr[None, None], (B, 1, H, W))
    return jnp.concatenate([x, xx_b, yy_b, rr_b], axis=1)


if __name__ == "__main__":
    k0, k1, k2 = jax.random.split(jax.random.PRNGKey(0), 3)

    # 1) lane-dense reshape path (H*W % 128 == 0), f32
    x = jax.random.normal(k0, (2, 4, 16, 16), dtype=jnp.float32)
    out = jax.block_until_ready(add_coords(x))
    assert out.shape == (2, 7, 16, 16), out.shape
    assert jnp.allclose(out, _reference(x), atol=1e-6, rtol=1e-6), "f32 mismatch"

    # 2) flattened-spatial fallback path (H*W % 128 != 0), partial last block
    x2 = jax.random.normal(k1, (2, 4, 10, 30), dtype=jnp.float32)
    out2 = jax.block_until_ready(add_coords(x2))
    assert out2.shape == (2, 7, 10, 30), out2.shape
    assert jnp.allclose(out2, _reference(x2), atol=1e-6, rtol=1e-6), "fallback mismatch"

    # 3) bf16 (dtype-aware sublane tiling)
    x3 = jax.random.normal(k2, (2, 4, 16, 16), dtype=jnp.float32).astype(jnp.bfloat16)
    out3 = jax.block_until_ready(add_coords(x3))
    assert jnp.allclose(out3.astype(jnp.float32), _reference(x3).astype(jnp.float32),
                        atol=2e-2, rtol=2e-2), "bf16 mismatch"

    print("KERNEL_OK")
</pallas_src>

<mosaic_0001>
module attributes {stable_mosaic.version = 11 : i64} {
  func.func @_addcoords_kernel(%arg0: i32, %arg1: i32, %arg2: memref<1x3x2x128xf32, #tpu.memory_space<vmem>>, %arg3: memref<1x4x2x128xf32, #tpu.memory_space<vmem>>, %arg4: memref<1x7x2x128xf32, #tpu.memory_space<vmem>>) attributes {dimension_semantics = [#tpu.dimension_semantics<parallel>, #tpu.dimension_semantics<parallel>], iteration_bounds = array<i64: 1, 2>, scalar_prefetch = 0 : i64, scratch_operands = 0 : i64, tpu.core_type = #tpu.core_type<tc>, window_params = [{transform_indices = @transform_0, window_bounds = array<i64: 1, 3, 2, 128>}, {transform_indices = @transform_1, window_bounds = array<i64: 1, 4, 2, 128>}, {transform_indices = @transform_2, window_bounds = array<i64: 1, 7, 2, 128>}]} {
    %c0 = arith.constant 0 : index
    %c0_0 = arith.constant 0 : index
    %c0_1 = arith.constant 0 : index
    %c0_2 = arith.constant 0 : index
    %0 = vector.load %arg3[%c0, %c0_0, %c0_1, %c0_2] : memref<1x4x2x128xf32, #tpu.memory_space<vmem>>, vector<1x4x2x128xf32>
    %c0_3 = arith.constant 0 : index
    %c0_4 = arith.constant 0 : index
    %c0_5 = arith.constant 0 : index
    %c0_6 = arith.constant 0 : index
    %1 = vector.load %arg4[%c0_3, %c0_4, %c0_5, %c0_6] : memref<1x7x2x128xf32, #tpu.memory_space<vmem>>, vector<1x4x2x128xf32>
    tpu.vector_store %arg4[%c0_3, %c0_4, %c0_5, %c0_6], %0 {strides = array<i32>} : memref<1x7x2x128xf32, #tpu.memory_space<vmem>>, vector<1x4x2x128xf32>,
    %c0_7 = arith.constant 0 : index
    %c0_8 = arith.constant 0 : index
    %c0_9 = arith.constant 0 : index
    %c0_10 = arith.constant 0 : index
    %2 = vector.load %arg2[%c0_7, %c0_8, %c0_9, %c0_10] : memref<1x3x2x128xf32, #tpu.memory_space<vmem>>, vector<1x3x2x128xf32>
    %c0_11 = arith.constant 0 : index
    %c4 = arith.constant 4 : index
    %c0_12 = arith.constant 0 : index
    %c0_13 = arith.constant 0 : index
    %3 = vector.load %arg4[%c0_11, %c4, %c0_12, %c0_13] : memref<1x7x2x128xf32, #tpu.memory_space<vmem>>, vector<1x3x2x128xf32>
    tpu.vector_store %arg4[%c0_11, %c4, %c0_12, %c0_13], %2 {strides = array<i32>} : memref<1x7x2x128xf32, #tpu.memory_space<vmem>>, vector<1x3x2x128xf32>,
    return
  }
  func.func @transform_0(%arg0: i32, %arg1: i32) -> (i32, i32, i32, i32) {
    %c0_i32 = arith.constant 0 : i32
    %c0_i32_0 = arith.constant 0 : i32
    %c0_i32_1 = arith.constant 0 : i32
    %c0_i32_2 = arith.constant 0 : i32
    return %c0_i32, %c0_i32_0, %arg0, %c0_i32_1 : i32, i32, i32, i32
  }
  func.func @transform_1(%arg0: i32, %arg1: i32) -> (i32, i32, i32, i32) {
    %c0_i32 = arith.constant 0 : i32
    %c0_i32_0 = arith.constant 0 : i32
    %c0_i32_1 = arith.constant 0 : i32
    return %arg1, %c0_i32, %arg0, %c0_i32_0 : i32, i32, i32, i32
  }
  func.func @transform_2(%arg0: i32, %arg1: i32) -> (i32, i32, i32, i32) {
    %c0_i32 = arith.constant 0 : i32
    %c0_i32_0 = arith.constant 0 : i32
    %c0_i32_1 = arith.constant 0 : i32
    return %arg1, %c0_i32, %arg0, %c0_i32_0 : i32, i32, i32, i32
  }
}

</mosaic_0001>

<llo_original>
// kernel: tpu_custom_call.1
$region0: #{tpu_custom_call.1}
  #allocation0 [shape = 'u32[]', space=smem, size = 0x4, offset = 0x4, fixed_abs, tag = 'smem constant byte address 0x4 - core index']
  #allocation1 [shape = 'u32[72,128]{1,0:T(1,128)}', space=vmem, size = 0x9000, scoped, tag = 'internal scratch']
  %s0 = inlined_call_operand.hbm [shape: f32[1,3,2,128], index: 0, kind: input, shape index: {}]
  %s1 = inlined_call_operand.hbm [shape: f32[2,4,2,128], index: 1, kind: input, shape index: {}]
  %s2 = inlined_call_operand.hbm [shape: f32[2,7,2,128], index: 2, kind: output, shape index: {}]
  %s3 = sld [smem:[#allocation0]]
  $region49: #{tpu_custom_call.1} parent=0
    _
  %s5 = ssub.s32 1, %s3
  %s6 = scalar_select 0, %s5, %s3
  $region1: #{tpu_custom_call.1} parent=0
    #allocation2 [shape = 'u8[3072]{0}', space=vmem, size = 0xc00, scoped, tag = 'input window, operand 0, single buffered']
    #allocation3 [shape = 's32[2]{0}', space=sflag, size = 0x8, scoped, tag = 'scoped memory for tpu_custom_call.1']
    #allocation4 [shape = 's32[2]{0}', space=sflag, size = 0x8, scoped, tag = 'scoped memory for tpu_custom_call.1']
    #allocation5 [shape = 'u8[8192]{0}', space=vmem, size = 0x2000, scoped, tag = 'input window, operand 1']
    #allocation6 [shape = 's32[2]{0}', space=sflag, size = 0x8, scoped, tag = 'scoped memory for tpu_custom_call.1']
    #allocation7 [shape = 'u8[14336]{0}', space=vmem, size = 0x3800, scoped, tag = 'output window, operand 0']
    %7 = vsyncpa [#allocation3], 0
    %8 = vsyncpa [#allocation6], 0
    %s9 = scalar_lea.sflag [#allocation6], 1
    %10 = vsyncpa %s9, 0
    %11 = vsyncpa [#allocation4], 0
    %s12 = scalar_lea.sflag [#allocation4], 1
    %13 = vsyncpa %s12, 0
    loop: start=0, step=1, limit=4
    $region2: #{tpu_custom_call.1} parent=1 // loop_pre_header
      _
    $region3: #{tpu_custom_call.1} parent=1 // loop_header
      %s15 = sphi 0, %s19
      %p16 = scmp.ge.s32.totalorder %s15, 4
      %s22 = sphi 0, %s34
      %s23 = sphi 0, %s30
      %s24 = sphi 0, %s22
      %s25 = sphi 0, %s23
      %s26 = sphi 0, %s24
      %s27 = sphi 0, %s25
      %s37 = sphi 0, %s39
      %s40 = sphi 0, %s37
      %s41 = sphi 0, %s40
      %s57 = sphi 0, %s41
      %s65 = sphi 0, %s67
      %s68 = sphi 0, %s65
      %s69 = sphi 0, %s68
      %s85 = sphi 0, %s69
      %s93 = sphi 0, %s95
      %s96 = sphi 0, %s93
      %s97 = sphi 0, %s96
      %s113 = sphi 0, %s97
    $region4: #{tpu_custom_call.1} parent=1 // loop_header_branch
      %18 = sbr.rel (%p16) target = $region8
    $region5: #{tpu_custom_call.1} parent=1 // loop_body
      %s20 = ssub.s32 %s15, 1
      %s21 = ssub.s32 %s15, 2
      %s28 = sadd.s32 1, %s23
      %p29 = scmp.ge.s32.totalorder %s28, 2
      %s30 = scalar_select %p29, 0, %s28
      %s31 = sadd.s32 1, %s22
      %s32 = scalar_select %p29, %s31, %s22
      %p33 = scmp.ge.s32.totalorder %s32, 1
      %s34 = scalar_select %p33, 0, %s32
      %s35 = ssub.s32 %s22, %s34
      %p36 = scmp.eq.s32.totalorder %s35, 0
      %s38 = sadd.s32 %s37, 1
      %s39 = scalar_select %p36, %s37, %s38
      %p42 = pneg %p36
      %p43 = scmp.eq.s32.totalorder %s15, 1
      %p44 = por %p42, %p43
      %p45 = scmp.ne.s32.totalorder %s37, %s40
      %p46 = scmp.eq.s32.totalorder %s15, 0
      %p47 = por %p45, %p46
      %p48 = scmp.ne.s32.totalorder %s37, %s40
      %p49 = scmp.eq.s32.totalorder %s20, 1
      %p50 = por %p48, %p49
      %p51 = scmp.ne.s32.totalorder %s40, %s41
      %p52 = scmp.eq.s32.totalorder %s20, 0
      %p53 = por %p51, %p52
      %p54 = scmp.ne.s32.totalorder %s40, %s41
      %p55 = scmp.eq.s32.totalorder %s21, 1
      %p56 = por %p54, %p55
      %p58 = scmp.ne.s32.totalorder %s41, %s57
      %p59 = scmp.eq.s32.totalorder %s21, 0
      %p60 = por %p58, %p59
      %s61 = ssub.s32 %s23, %s30
      %s62 = ssub.s32 %s22, %s34
      %s63 = sor.u32 %s61, %s62
      %p64 = scmp.eq.s32.totalorder %s63, 0
      %s66 = sadd.s32 %s65, 1
      %s67 = scalar_select %p64, %s65, %s66
      %p70 = pneg %p64
      %p71 = scmp.eq.s32.totalorder %s15, 1
      %p72 = por %p70, %p71
      %p73 = scmp.ne.s32.totalorder %s65, %s68
      %p74 = scmp.eq.s32.totalorder %s15, 0
      %p75 = por %p73, %p74
      %p76 = scmp.ne.s32.totalorder %s65, %s68
      %p77 = scmp.eq.s32.totalorder %s20, 1
      %p78 = por %p76, %p77
      %p79 = scmp.ne.s32.totalorder %s68, %s69
      %p80 = scmp.eq.s32.totalorder %s20, 0
      %p81 = por %p79, %p80
      %p82 = scmp.ne.s32.totalorder %s68, %s69
      %p83 = scmp.eq.s32.totalorder %s21, 1
      %p84 = por %p82, %p83
      %p86 = scmp.ne.s32.totalorder %s69, %s85
      %p87 = scmp.eq.s32.totalorder %s21, 0
      %p88 = por %p86, %p87
      %s89 = ssub.s32 %s23, %s30
      %s90 = ssub.s32 %s22, %s34
      %s91 = sor.u32 %s89, %s90
      %p92 = scmp.eq.s32.totalorder %s91, 0
      %s94 = sadd.s32 %s93, 1
      %s95 = scalar_select %p92, %s93, %s94
      %p98 = pneg %p92
      %p99 = scmp.eq.s32.totalorder %s15, 1
      %p100 = por %p98, %p99
      %p101 = scmp.ne.s32.totalorder %s93, %s96
      %p102 = scmp.eq.s32.totalorder %s15, 0
      %p103 = por %p101, %p102
      %p104 = scmp.ne.s32.totalorder %s93, %s96
      %p105 = scmp.eq.s32.totalorder %s20, 1
      %p106 = por %p104, %p105
      %p107 = scmp.ne.s32.totalorder %s96, %s97
      %p108 = scmp.eq.s32.totalorder %s20, 0
      %p109 = por %p107, %p108
      %p110 = scmp.ne.s32.totalorder %s96, %s97
      %p111 = scmp.eq.s32.totalorder %s21, 1
      %p112 = por %p110, %p111
      %p114 = scmp.ne.s32.totalorder %s97, %s113
      %p115 = scmp.eq.s32.totalorder %s21, 0
      %p116 = por %p114, %p115
      %p117 = scmp.le.s32.totalorder 1, %s15
      %p118 = scmp.lt.s32.totalorder %s15, 3
      %p119 = pnand %p117, %p118
      %p120 = pneg %p119
      // Predicated region
      $region9: #{tpu_custom_call.1} parent=5 // pred_check
        _
      $region10: #{tpu_custom_call.1} parent=5 // pred_check_branch
        %122 = sbr.rel (%p119) target = $region12
      $region11: #{tpu_custom_call.1} parent=5 // pred_region
        %s123 = ssub.s32 %s15, 1
        // Predicated region
        $region13: #{tpu_custom_call.1} parent=11 // pred_check
          %p124 = pneg %p53
        $region14: #{tpu_custom_call.1} parent=11 // pred_check_branch
          %126 = sbr.rel (%p124) target = $region16
        $region15: #{tpu_custom_call.1} parent=11 // pred_region
          %128 = vsyncadd [#allocation3], 0
          %s129 = smul.addr %s24, 2
          %s130 = scalar_lea.hbm %s0, %s129
          %s131 = sshll.u32 %s130, 4
          %s132 = int_to_ptr.hbm [resolvable:$true] %s131
          %s133 = sshll.u32 [#allocation2], 4
          %s134 = int_to_ptr.vmem [resolvable:$true] %s133
          %139 = dma.hbm_to_vmem [thread:$0]  %s132, 96, %s134, [#allocation3], 32, 32, 2
        $region16: #{tpu_custom_call.1} parent=11 // pred_fallthru
          _
      $region12: #{tpu_custom_call.1} parent=5 // pred_fallthru
        _
      %p140 = scmp.lt.s32.totalorder %s15, 2
      // Predicated region
      $region17: #{tpu_custom_call.1} parent=5 // pred_check
        %p141 = pneg %p140
      $region18: #{tpu_custom_call.1} parent=5 // pred_check_branch
        %143 = sbr.rel (%p141) target = $region20
      $region19: #{tpu_custom_call.1} parent=5 // pred_region
        // Predicated region
        $region21: #{tpu_custom_call.1} parent=19 // pred_check
          %p144 = pneg %p75
        $region22: #{tpu_custom_call.1} parent=19 // pred_check_branch
          %146 = sbr.rel (%p144) target = $region24
        $region23: #{tpu_custom_call.1} parent=19 // pred_region
          %s147 = sand.u32 %s65, 1
          %s148 = scalar_lea.sflag [#allocation6], %s147
          %s149 = sand.u32 %s65, 1
          %s150 = smul.addr %s149, 8
          %s151 = scalar_lea.vmem [#allocation5], %s150
          %153 = vsyncadd %s148, 0
          %s154 = smul.addr %s23, 4
          %s155 = sadd.s32 %s22, %s154
          %s156 = smul.addr %s155, 2
          %s157 = scalar_lea.hbm %s1, %s156
          %s158 = sshll.u32 %s157, 4
          %s159 = int_to_ptr.hbm [resolvable:$true] %s158
          %s160 = sshll.u32 %s151, 4
          %s161 = int_to_ptr.vmem [resolvable:$true] %s160
          %166 = dma.hbm_to_vmem [thread:$0]  %s159, 128, %s161, %s148, 32, 32, 2
        $region24: #{tpu_custom_call.1} parent=19 // pred_fallthru
          _
      $region20: #{tpu_custom_call.1} parent=5 // pred_fallthru
        _
      %p167 = scmp.le.s32.totalorder 1, %s15
      %p168 = scmp.lt.s32.totalorder %s15, 3
      %p169 = pnand %p167, %p168
      %p170 = pneg %p169
      // Predicated region
      $region25: #{tpu_custom_call.1} parent=5 // pred_check
        _
      $region26: #{tpu_custom_call.1} parent=5 // pred_check_branch
        %172 = sbr.rel (%p169) target = $region28
      $region27: #{tpu_custom_call.1} parent=5 // pred_region
        %s173 = ssub.s32 %s15, 1
        // Predicated region
        $region29: #{tpu_custom_call.1} parent=27 // pred_check
          %p174 = pneg %p53
        $region30: #{tpu_custom_call.1} parent=27 // pred_check_branch
          %176 = sbr.rel (%p174) target = $region32
        $region31: #{tpu_custom_call.1} parent=27 // pred_region
          %178 = dma.done [#allocation3], 96
        $region32: #{tpu_custom_call.1} parent=27 // pred_fallthru
          _
        %s179 = sand.u32 %s68, 1
        %s180 = scalar_lea.sflag [#allocation6], %s179
        %s181 = sand.u32 %s68, 1
        %s182 = smul.addr %s181, 8
        %s183 = scalar_lea.vmem [#allocation5], %s182
        // Predicated region
        $region33: #{tpu_custom_call.1} parent=27 // pred_check
          %p184 = pneg %p81
        $region34: #{tpu_custom_call.1} parent=27 // pred_check_branch
          %186 = sbr.rel (%p184) target = $region36
        $region35: #{tpu_custom_call.1} parent=27 // pred_region
          %188 = dma.done %s180, 128
        $region36: #{tpu_custom_call.1} parent=27 // pred_fallthru
          _
        %p189 = pneg %p53
        %p190 = pneg %p50
        %s191 = sand.u32 %s68, 1
        %s192 = scalar_lea.sflag [#allocation6], %s191
        %s193 = sand.u32 %s68, 1
        %s194 = smul.addr %s193, 8
        %s195 = scalar_lea.vmem [#allocation5], %s194
        %p196 = pneg %p81
        %p197 = pneg %p78
        %p198 = pneg %p109
        %p199 = pneg %p106
        %s200 = sand.u32 %s96, 1
        %s201 = scalar_lea.sflag [#allocation4], %s200
        %s202 = sand.u32 %s96, 1
        %s203 = smul.addr %s202, 14
        %s204 = scalar_lea.vmem [#allocation7], %s203
        %v205 = vld [vmem:[%s183] sm:$0x3]
        %v206 = vld [vmem:[%s183 + $0x2] sm:$0x3]
        %v207 = vld [vmem:[%s183 + $0x4] sm:$0x3]
        %v208 = vld [vmem:[%s183 + $0x6] sm:$0x3]
        %209 = vst [vmem:[%s204] sm:$0x3] %v205
        %210 = vst [vmem:[%s204 + $0x2] sm:$0x3] %v206
        %211 = vst [vmem:[%s204 + $0x4] sm:$0x3] %v207
        %212 = vst [vmem:[%s204 + $0x6] sm:$0x3] %v208
        %v213 = vld [vmem:[#allocation2] sm:$0x3]
        %v214 = vld [vmem:[#allocation2 + $0x2] sm:$0x3]
        %v215 = vld [vmem:[#allocation2 + $0x4] sm:$0x3]
        %s216 = scalar_lea.vmem %s204, 8 [#allocation7]
        %217 = vst [vmem:[%s216] sm:$0x3] %v213
        %218 = vst [vmem:[%s216 + $0x2] sm:$0x3] %v214
        %219 = vst [vmem:[%s216 + $0x4] sm:$0x3] %v215
        %s220 = sand.u32 %s96, 1
        %s221 = scalar_lea.sflag [#allocation4], %s220
        %s222 = sand.u32 %s96, 1
        %s223 = smul.addr %s222, 14
        %s224 = scalar_lea.vmem [#allocation7], %s223
        // Predicated region
        $region37: #{tpu_custom_call.1} parent=27 // pred_check
          %p225 = pneg %p106
        $region38: #{tpu_custom_call.1} parent=27 // pred_check_branch
          %227 = sbr.rel (%p225) target = $region40
        $region39: #{tpu_custom_call.1} parent=27 // pred_region
          %229 = vsyncadd %s221, 0
          %s230 = smul.addr %s25, 7
          %s231 = sadd.s32 %s24, %s230
          %s232 = smul.addr %s231, 2
          %s233 = scalar_lea.hbm %s2, %s232
          %s234 = sshll.u32 %s224, 4
          %s235 = int_to_ptr.vmem [resolvable:$true] %s234
          %s236 = sshll.u32 %s233, 4
          %s237 = int_to_ptr.hbm [resolvable:$true] %s236
          %242 = dma.vmem_to_hbm [thread:$0]  %s235, 224, %s237, %s221, 32, 32, 2
        $region40: #{tpu_custom_call.1} parent=27 // pred_fallthru
          _
      $region28: #{tpu_custom_call.1} parent=5 // pred_fallthru
        _
      %p243 = scmp.le.s32.totalorder 2, %s15
      // Predicated region
      $region41: #{tpu_custom_call.1} parent=5 // pred_check
        %p244 = pneg %p243
      $region42: #{tpu_custom_call.1} parent=5 // pred_check_branch
        %246 = sbr.rel (%p244) target = $region44
      $region43: #{tpu_custom_call.1} parent=5 // pred_region
        %s247 = ssub.s32 %s15, 2
        // Predicated region
        $region45: #{tpu_custom_call.1} parent=43 // pred_check
          %p248 = pneg %p112
        $region46: #{tpu_custom_call.1} parent=43 // pred_check_branch
          %250 = sbr.rel (%p248) target = $region48
        $region47: #{tpu_custom_call.1} parent=43 // pred_region
          %s251 = sand.u32 %s97, 1
          %s252 = scalar_lea.sflag [#allocation4], %s251
          %s253 = sand.u32 %s97, 1
          %s254 = smul.addr %s253, 14
          %s255 = scalar_lea.vmem [#allocation7], %s254
          %257 = dma.done %s252, 224
        $region48: #{tpu_custom_call.1} parent=43 // pred_fallthru
          _
      $region44: #{tpu_custom_call.1} parent=5 // pred_fallthru
        _
    $region6: #{tpu_custom_call.1} parent=1 // loop_footer
      %s19 = sadd.s32 1, %s15
    $region7: #{tpu_custom_call.1} parent=1 // loop_footer_branch
      %14 = sbr.rel target = $region3
    $region8: #{tpu_custom_call.1} parent=1 // loop_exit
      _
    %258 = vsyncpa [#allocation3], 1
    %s259 = scalar_lea.sflag [#allocation3], 1
    %260 = vsyncpa %s259, 1
    %261 = vsyncpa [#allocation6], 1
    %s262 = scalar_lea.sflag [#allocation6], 1
    %263 = vsyncpa %s262, 1
    %264 = vsyncpa [#allocation4], 1
    %s265 = scalar_lea.sflag [#allocation4], 1
    %266 = vsyncpa %s265, 1

</llo_original>
